<compile_context>
chip_gen: v6e
topology: v6e:2x2x1
jax: 0.10.0
libtpu: 0.0.40
codegen_flags: <defaults>
</compile_context>

<pallas_src>
import functools

import jax
import jax.numpy as jnp
from jax.experimental import pallas as pl
from jax.experimental.pallas import tpu as pltpu


def _round_up(x, m):
    return ((x + m - 1) // m) * m


def _tpu_info():
    """Returns (generation, VMEM bytes per TensorCore) with safe fallbacks."""
    gen = 0
    try:
        kind = jax.devices()[0].device_kind.lower()
        for g in (7, 6, 5, 4):
            if "v%d" % g in kind:
                gen = g
                break
    except Exception:
        pass
    cap = None
    try:
        cap = int(getattr(pltpu.get_tpu_info(), "vmem_capacity_bytes", 0)) or None
    except Exception:
        cap = None
    if cap is None:
        cap = (64 << 20) if gen >= 7 else (128 << 20)
    if gen == 0:
        gen = 6
    return gen, cap


# ---------------------------------------------------------------------------
# Kernels
# ---------------------------------------------------------------------------
def _ffn_kernel_resident(x_ref, w1_ref, b1_ref, w2_ref, b2_ref, o_ref):
    """Whole FFN for one row tile; W1/W2/biases are VMEM-resident."""
    h = jnp.dot(x_ref[...], w1_ref[...], preferred_element_type=jnp.float32)
    h = jnp.maximum(h + b1_ref[...], 0.0)                    # bias + ReLU (f32, VPU)
    out = jnp.dot(h.astype(w2_ref.dtype), w2_ref[...],
                  preferred_element_type=jnp.float32)
    o_ref[...] = (out + b2_ref[...]).astype(o_ref.dtype)


def _ffn_kernel_streamed(x_ref, w1_ref, b1_ref, w2_ref, b2_ref, o_ref, acc_ref):
    """One (row-tile, hidden-slab) step; second matmul accumulated in f32 scratch."""
    k = pl.program_id(1)

    @pl.when(k == 0)
    def _():
        acc_ref[...] = jnp.zeros_like(acc_ref)

    h = jnp.dot(x_ref[...], w1_ref[...], preferred_element_type=jnp.float32)
    h = jnp.maximum(h + b1_ref[...], 0.0)
    acc_ref[...] += jnp.dot(h.astype(w2_ref.dtype), w2_ref[...],
                            preferred_element_type=jnp.float32)

    @pl.when(k == pl.num_programs(1) - 1)
    def _():
        o_ref[...] = (acc_ref[...] + b2_ref[...]).astype(o_ref.dtype)


# ---------------------------------------------------------------------------
# Jitted implementation (all tiling decisions are static arguments)
# ---------------------------------------------------------------------------
@functools.partial(
    jax.jit,
    static_argnames=("block_m", "block_k", "d_model_p", "dim_p", "m_p",
                     "resident", "vmem_limit", "compute_dtype"))
def _ffn_impl(x, w1, b1, w2, b2, *, block_m, block_k, d_model_p, dim_p, m_p,
              resident, vmem_limit, compute_dtype):
    out_dtype = x.dtype
    batch, seq, d_model = x.shape
    dim = w1.shape[1]
    M = batch * seq

    if compute_dtype is not None:
        x = x.astype(compute_dtype)
        w1 = w1.astype(compute_dtype)
        w2 = w2.astype(compute_dtype)
    # Biases live on the f32 accumulation path.
    b1 = b1.reshape(1, dim).astype(jnp.float32)
    b2 = b2.reshape(1, d_model).astype(jnp.float32)

    # -- padding copies only when the static shapes actually require it ------
    x2d = x.reshape(M, d_model)
    if (m_p, d_model_p) != (M, d_model):
        x2d = jnp.zeros((m_p, d_model_p), x2d.dtype).at[:M, :d_model].set(x2d)
    if (d_model_p, dim_p) != (d_model, dim):
        w1 = jnp.zeros((d_model_p, dim_p), w1.dtype).at[:d_model, :dim].set(w1)
        w2 = jnp.zeros((dim_p, d_model_p), w2.dtype).at[:dim, :d_model].set(w2)
    if dim_p != dim:
        b1 = jnp.zeros((1, dim_p), jnp.float32).at[:, :dim].set(b1)
    if d_model_p != d_model:
        b2 = jnp.zeros((1, d_model_p), jnp.float32).at[:, :d_model].set(b2)

    bx = jnp.dtype(x2d.dtype).itemsize
    bw = jnp.dtype(w1.dtype).itemsize
    bo = jnp.dtype(out_dtype).itemsize
    n_row_tiles = m_p // block_m

    if resident:
        grid = (n_row_tiles,)
        in_specs = [
            pl.BlockSpec((block_m, d_model_p), lambda i: (i, 0)),   # x row tile
            pl.BlockSpec((d_model_p, dim_p),   lambda i: (0, 0)),   # W1 (resident)
            pl.BlockSpec((1, dim_p),           lambda i: (0, 0)),   # b1 (resident)
            pl.BlockSpec((dim_p, d_model_p),   lambda i: (0, 0)),   # W2 (resident)
            pl.BlockSpec((1, d_model_p),       lambda i: (0, 0)),   # b2 (resident)
        ]
        out_specs = pl.BlockSpec((block_m, d_model_p), lambda i: (i, 0))
        scratch_shapes = []
        kernel = _ffn_kernel_resident
        dim_sem = ("parallel",)
        weight_fetches = 1                                          # single DMA
    else:
        grid = (n_row_tiles, dim_p // block_k)
        in_specs = [
            pl.BlockSpec((block_m, d_model_p), lambda i, k: (i, 0)),  # x (resident over k)
            pl.BlockSpec((d_model_p, block_k), lambda i, k: (0, k)),  # W1 column slab
            pl.BlockSpec((1, block_k),         lambda i, k: (0, k)),  # b1 slab
            pl.BlockSpec((block_k, d_model_p), lambda i, k: (k, 0)),  # W2 row slab
            pl.BlockSpec((1, d_model_p),       lambda i, k: (0, 0)),  # b2
        ]
        out_specs = pl.BlockSpec((block_m, d_model_p), lambda i, k: (i, 0))
        scratch_shapes = [pltpu.VMEM((block_m, d_model_p), jnp.float32)]
        kernel = _ffn_kernel_streamed
        dim_sem = ("parallel", "arbitrary")
        weight_fetches = n_row_tiles              # slabs re-streamed per row tile

    cost = pl.CostEstimate(
        flops=4 * M * d_model * dim,              # two matmuls
        transcendentals=0,
        bytes_accessed=int(m_p * d_model_p * bx
                           + weight_fetches * 2 * d_model_p * dim_p * bw
                           + dim_p * 4 + d_model_p * 4
                           + m_p * d_model_p * bo))

    out2d = pl.pallas_call(
        kernel,
        out_shape=jax.ShapeDtypeStruct((m_p, d_model_p), out_dtype),
        grid_spec=pltpu.PrefetchScalarGridSpec(
            num_scalar_prefetch=0,
            grid=grid,
            in_specs=in_specs,
            out_specs=out_specs,
            scratch_shapes=scratch_shapes,
        ),
        compiler_params=pltpu.CompilerParams(
            dimension_semantics=dim_sem,
            vmem_limit_bytes=vmem_limit),
        cost_estimate=cost,
    )(x2d, w1, b1, w2, b2)

    if (m_p, d_model_p) != (M, d_model):
        out2d = out2d[:M, :d_model]
    return out2d.reshape(batch, seq, d_model)


# ---------------------------------------------------------------------------
# Public wrapper: chooses tiling / residency from static shapes + hardware
# ---------------------------------------------------------------------------
def feed_forward(x, w1, b1, w2, b2, *, block_m=None, block_k=None,
                 compute_dtype=jnp.bfloat16, force_streamed=False):
    """x: [batch, seq, d_model] -> [batch, seq, d_model].

    w1: [d_model, dim], b1: [1, dim] (or [dim]), w2: [dim, d_model],
    b2: [1, d_model] (or [d_model]).  Computes ReLU(x @ W1 + b1) @ W2 + b2
    (PyTorch nn.Linear semantics with weights stored as [in, out]).
    Dropout is the identity (eval mode).
    """
    batch, seq, d_model = x.shape
    dim = w1.shape[1]
    M = batch * seq

    gen, vmem_cap = _tpu_info()
    cdt = jnp.dtype(compute_dtype) if compute_dtype is not None else jnp.dtype(x.dtype)
    bw = cdt.itemsize                       # x / weight bytes in compute dtype
    bo = jnp.dtype(x.dtype).itemsize        # output bytes

    # Lane alignment: 256 fills the 2x256x256 MXU on v6e/v7x, but only when the
    # array needs padding anyway (never add copies to an already-aligned model).
    lane = 256 if (gen >= 6 and d_model % 128 != 0) else 128
    d_model_p = _round_up(d_model, lane)
    m_align = 16 if bw < 4 else 8           # sublane packing for the row tile

    # Generation-aware defaults.
    if block_m is None:
        if vmem_cap >= 96 << 20:            # v5e / v6e: 128 MiB VMEM
            block_m = 1024 if bw <= 2 else 512
        else:                               # v7x: 64 MiB VMEM per TensorCore
            block_m = 512 if bw <= 2 else 256
    if block_k is None:
        block_k = 512
    block_m = _round_up(max(m_align, min(block_m, _round_up(M, m_align))), m_align)
    block_k = _round_up(max(128, min(block_k, _round_up(dim, 128))), 128)

    dim_p_min = _round_up(dim, 128)
    vmem_budget = int(0.70 * vmem_cap)

    # Conservative working-set models (inputs/outputs double-buffered, f32
    # intermediates counted explicitly).
    def resident_bytes(bm, dp):
        return (2 * bm * d_model_p * bw            # x row tiles
                + 2 * d_model_p * dp * bw          # W1 (buffer pair, DMA'd once)
                + 2 * dp * d_model_p * bw          # W2
                + 2 * (dp + d_model_p) * 4         # biases
                + 2 * bm * d_model_p * bo          # output tiles
                + bm * dp * 4)                     # f32 hidden intermediate

    def streamed_bytes(bm, bk):
        return (2 * bm * d_model_p * bw            # x row tiles
                + 2 * d_model_p * bk * bw          # W1 slabs
                + 2 * bk * d_model_p * bw          # W2 slabs
                + 2 * (bk + d_model_p) * 4         # bias slabs
                + 2 * bm * d_model_p * bo          # output tiles
                + bm * d_model_p * 4               # f32 accumulator scratch
                + bm * bk * 4)                     # f32 hidden slab intermediate

    resident = (not force_streamed) and resident_bytes(m_align, dim_p_min) <= vmem_budget

    if resident:
        dim_p = dim_p_min
        while block_m > m_align and resident_bytes(block_m, dim_p) > vmem_budget:
            block_m = max(m_align, _round_up(block_m // 2, m_align))
        # Megacore (v7x has 2 TCs): give the "parallel" row axis >= 2 tiles when
        # M allows it.  Free here since weights are resident (no re-stream cost).
        if _round_up(M, block_m) // block_m < 2 and M > m_align:
            block_m = _round_up((M + 1) // 2, m_align)
        block_k = dim_p
        working = resident_bytes(block_m, dim_p)
    else:
        dim_p = _round_up(dim, block_k)
        while block_m > m_align and streamed_bytes(block_m, block_k) > vmem_budget:
            block_m = max(m_align, _round_up(block_m // 2, m_align))
        while block_k > 128 and streamed_bytes(block_m, block_k) > vmem_budget:
            block_k = max(128, _round_up(block_k // 2, 128))
            dim_p = _round_up(dim, block_k)
        working = streamed_bytes(block_m, block_k)

    m_p = _round_up(M, block_m)
    vmem_limit = int(min(max(working + (4 << 20), 32 << 20), int(0.9 * vmem_cap)))

    return _ffn_impl(x, w1, b1, w2, b2,
                     block_m=block_m, block_k=block_k,
                     d_model_p=d_model_p, dim_p=dim_p, m_p=m_p,
                     resident=resident, vmem_limit=vmem_limit,
                     compute_dtype=compute_dtype)


def init_params(key, d_model, dim, dtype=jnp.float32):
    """Deterministic init mimicking nn.Linear (uniform +-1/sqrt(fan_in))."""
    k1, k2, k3, k4 = jax.random.split(key, 4)
    bound1 = 1.0 / (d_model ** 0.5)
    bound2 = 1.0 / (dim ** 0.5)
    w1 = jax.random.uniform(k1, (d_model, dim), dtype, -bound1, bound1)
    b1 = jax.random.uniform(k2, (1, dim), dtype, -bound1, bound1)
    w2 = jax.random.uniform(k3, (dim, d_model), dtype, -bound2, bound2)
    b2 = jax.random.uniform(k4, (1, d_model), dtype, -bound2, bound2)
    return w1, b1, w2, b2


if __name__ == "__main__":
    d_model, dim, dropout = 32, 64, 0.1   # dropout inert at inference
    batch, seq = 2, 8

    key = jax.random.PRNGKey(0)
    kx, kp = jax.random.split(key)
    x = jax.random.normal(kx, (batch, seq, d_model), jnp.float32)
    w1, b1, w2, b2 = init_params(kp, d_model, dim)

    # Reference in plain JAX (same math as the PyTorch module in eval mode).
    ref = (jnp.maximum(x.reshape(-1, d_model) @ w1 + b1, 0.0) @ w2 + b2)
    ref = ref.reshape(batch, seq, d_model)

    # f32 matmuls, weight-resident path: exact-tolerance check.
    out = feed_forward(x, w1, b1, w2, b2, compute_dtype=jnp.float32)
    jax.block_until_ready(out)
    assert jnp.allclose(out, ref, atol=1e-5, rtol=1e-5), "f32 resident mismatch"

    # f32 matmuls, streamed (hidden-slab) path: exact-tolerance check.
    out_s = feed_forward(x, w1, b1, w2, b2, compute_dtype=jnp.float32,
                         force_streamed=True)
    jax.block_until_ready(out_s)
    assert jnp.allclose(out_s, ref, atol=1e-5, rtol=1e-5), "f32 streamed mismatch"

    # Default bf16 MXU path (resident): loose-tolerance check.
    out_bf = feed_forward(x, w1, b1, w2, b2)
    jax.block_until_ready(out_bf)
    assert jnp.allclose(out_bf, ref, atol=1e-1, rtol=1e-1), "bf16 resident mismatch"

    # bf16, streamed path: loose-tolerance check.
    out_bfs = feed_forward(x, w1, b1, w2, b2, force_streamed=True)
    jax.block_until_ready(out_bfs)
    assert jnp.allclose(out_bfs, ref, atol=1e-1, rtol=1e-1), "bf16 streamed mismatch"

    print("KERNEL_OK")
</pallas_src>

<mosaic_0001>
module attributes {stable_mosaic.version = 11 : i64} {
  func.func @_ffn_kernel_resident(%arg0: i32, %arg1: memref<8x256xf32, #tpu.memory_space<vmem>>, %arg2: memref<256x128xf32, #tpu.memory_space<vmem>>, %arg3: memref<1x128xf32, #tpu.memory_space<vmem>>, %arg4: memref<128x256xf32, #tpu.memory_space<vmem>>, %arg5: memref<1x256xf32, #tpu.memory_space<vmem>>, %arg6: memref<8x256xf32, #tpu.memory_space<vmem>>) attributes {dimension_semantics = [#tpu.dimension_semantics<parallel>], iteration_bounds = array<i64: 2>, scalar_prefetch = 0 : i64, scratch_operands = 0 : i64, tpu.core_type = #tpu.core_type<tc>, window_params = [{transform_indices = @transform_0, window_bounds = array<i64: 8, 256>}, {pipeline_mode = #tpu.pipeline_mode<synchronous>, transform_indices = @transform_1, window_bounds = array<i64: 256, 128>}, {pipeline_mode = #tpu.pipeline_mode<synchronous>, transform_indices = @transform_2, window_bounds = array<i64: 1, 128>}, {pipeline_mode = #tpu.pipeline_mode<synchronous>, transform_indices = @transform_3, window_bounds = array<i64: 128, 256>}, {pipeline_mode = #tpu.pipeline_mode<synchronous>, transform_indices = @transform_4, window_bounds = array<i64: 1, 256>}, {transform_indices = @transform_5, window_bounds = array<i64: 8, 256>}]} {
    %c0 = arith.constant 0 : index
    %c0_0 = arith.constant 0 : index
    %0 = vector.load %arg1[%c0, %c0_0] : memref<8x256xf32, #tpu.memory_space<vmem>>, vector<8x256xf32>
    %c0_1 = arith.constant 0 : index
    %c0_2 = arith.constant 0 : index
    %1 = vector.load %arg2[%c0_1, %c0_2] : memref<256x128xf32, #tpu.memory_space<vmem>>, vector<256x128xf32>
    %cst = arith.constant dense<0.000000e+00> : vector<8x128xf32>
    %2 = tpu.matmul %0, %1, %cst {dimension_numbers = #tpu.dot_dimension_numbers<[1], [0], [0], [1], [0, 0, 1, 1], [], []>} : vector<8x256xf32>, vector<256x128xf32>, vector<8x128xf32> -> vector<8x128xf32>
    %c0_3 = arith.constant 0 : index
    %c0_4 = arith.constant 0 : index
    %3 = vector.load %arg3[%c0_3, %c0_4] : memref<1x128xf32, #tpu.memory_space<vmem>>, vector<1x128xf32>
    %4 = vector.broadcast %3 : vector<1x128xf32> to vector<8x128xf32>
    %5 = arith.addf %2, %4 : vector<8x128xf32>
    %cst_5 = arith.constant 0.000000e+00 : f32
    %6 = vector.broadcast %cst_5 : f32 to vector<8x128xf32>
    %7 = arith.maximumf %5, %6 : vector<8x128xf32>
    %c0_6 = arith.constant 0 : index
    %c0_7 = arith.constant 0 : index
    %8 = vector.load %arg4[%c0_6, %c0_7] : memref<128x256xf32, #tpu.memory_space<vmem>>, vector<128x256xf32>
    %cst_8 = arith.constant dense<0.000000e+00> : vector<8x256xf32>
    %9 = tpu.matmul %7, %8, %cst_8 {dimension_numbers = #tpu.dot_dimension_numbers<[1], [0], [0], [1], [0, 0, 1, 1], [], []>} : vector<8x128xf32>, vector<128x256xf32>, vector<8x256xf32> -> vector<8x256xf32>
    %c0_9 = arith.constant 0 : index
    %c0_10 = arith.constant 0 : index
    %10 = vector.load %arg5[%c0_9, %c0_10] : memref<1x256xf32, #tpu.memory_space<vmem>>, vector<1x256xf32>
    %11 = vector.broadcast %10 : vector<1x256xf32> to vector<8x256xf32>
    %12 = arith.addf %9, %11 : vector<8x256xf32>
    %c0_11 = arith.constant 0 : index
    %c0_12 = arith.constant 0 : index
    %13 = vector.load %arg6[%c0_11, %c0_12] : memref<8x256xf32, #tpu.memory_space<vmem>>, vector<8x256xf32>
    tpu.vector_store %arg6[%c0_11, %c0_12], %12 {strides = array<i32>} : memref<8x256xf32, #tpu.memory_space<vmem>>, vector<8x256xf32>,
    return
  }
  func.func @transform_0(%arg0: i32) -> (i32, i32) {
    %c0_i32 = arith.constant 0 : i32
    %c0_i32_0 = arith.constant 0 : i32
    return %arg0, %c0_i32 : i32, i32
  }
  func.func @transform_1(%arg0: i32) -> (i32, i32) {
    %c0_i32 = arith.constant 0 : i32
    %c0_i32_0 = arith.constant 0 : i32
    %c0_i32_1 = arith.constant 0 : i32
    return %c0_i32, %c0_i32_0 : i32, i32
  }
  func.func @transform_2(%arg0: i32) -> (i32, i32) {
    %c0_i32 = arith.constant 0 : i32
    %c0_i32_0 = arith.constant 0 : i32
    %c0_i32_1 = arith.constant 0 : i32
    return %c0_i32, %c0_i32_0 : i32, i32
  }
  func.func @transform_3(%arg0: i32) -> (i32, i32) {
    %c0_i32 = arith.constant 0 : i32
    %c0_i32_0 = arith.constant 0 : i32
    %c0_i32_1 = arith.constant 0 : i32
    return %c0_i32, %c0_i32_0 : i32, i32
  }
  func.func @transform_4(%arg0: i32) -> (i32, i32) {
    %c0_i32 = arith.constant 0 : i32
    %c0_i32_0 = arith.constant 0 : i32
    %c0_i32_1 = arith.constant 0 : i32
    return %c0_i32, %c0_i32_0 : i32, i32
  }
  func.func @transform_5(%arg0: i32) -> (i32, i32) {
    %c0_i32 = arith.constant 0 : i32
    %c0_i32_0 = arith.constant 0 : i32
    return %arg0, %c0_i32 : i32, i32
  }
}

</mosaic_0001>

<llo_original>
// kernel: _ffn_impl.1
$region0: #{_ffn_impl.1}
  #allocation0 [shape = 'u32[]', space=smem, size = 0x4, offset = 0x4, fixed_abs, tag = 'smem constant byte address 0x4 - core index']
  #allocation1 [shape = 'u32[144,128]{1,0:T(1,128)}', space=vmem, size = 0x12000, scoped, tag = 'internal scratch']
  %s0 = inlined_call_operand.vmem [shape: f32[16,256], index: 0, kind: input, shape index: {}]
  %s1 = inlined_call_operand.vmem [shape: f32[256,128], index: 1, kind: input, shape index: {}]
  %s2 = inlined_call_operand.vmem [shape: f32[1,128], index: 2, kind: input, shape index: {}]
  %s3 = inlined_call_operand.vmem [shape: f32[128,256], index: 3, kind: input, shape index: {}]
  %s4 = inlined_call_operand.vmem [shape: f32[1,256], index: 4, kind: input, shape index: {}]
  %s5 = inlined_call_operand.vmem [shape: f32[16,256], index: 5, kind: output, shape index: {}]
  %s6 = sld [smem:[#allocation0]]
  $region53: #{_ffn_impl.1} parent=0
    _
  %s8 = ssub.s32 1, %s6
  %s9 = scalar_select 0, %s8, %s6
  loop: start=0, step=1, limit=4
  $region2: #{_ffn_impl.1} parent=0 // loop_pre_header
    _
  $region3: #{_ffn_impl.1} parent=0 // loop_header
    %s11 = sphi 0, %s15
    %p12 = scmp.ge.s32.totalorder %s11, 4
    %s21 = sphi 0, %s23
    %s24 = sphi 0, %s21
    %s25 = sphi 0, %s24
    %s41 = sphi 0, %s25
    %s45 = sphi 0, %s45
    %s47 = sphi 0, %s45
    %s48 = sphi 0, %s47
    %s62 = sphi 0, %s48
    %s66 = sphi 0, %s66
    %s68 = sphi 0, %s66
    %s69 = sphi 0, %s68
    %s83 = sphi 0, %s69
    %s87 = sphi 0, %s87
    %s89 = sphi 0, %s87
    %s90 = sphi 0, %s89
    %s104 = sphi 0, %s90
    %s108 = sphi 0, %s108
    %s110 = sphi 0, %s108
    %s111 = sphi 0, %s110
    %s125 = sphi 0, %s111
    %s131 = sphi 0, %s133
    %s134 = sphi 0, %s131
    %s135 = sphi 0, %s134
    %s151 = sphi 0, %s135
  $region4: #{_ffn_impl.1} parent=0 // loop_header_branch
    %14 = sbr.rel (%p12) target = $region8
  $region5: #{_ffn_impl.1} parent=0 // loop_body
    %s16 = ssub.s32 %s11, 1
    %s17 = ssub.s32 %s11, 2
    %s18 = sadd.s32 %s11, 1
    %s19 = ssub.s32 %s11, %s18
    %p20 = scmp.eq.s32.totalorder %s19, 0
    %s22 = sadd.s32 %s21, 1
    %s23 = scalar_select %p20, %s21, %s22
    %p26 = pneg %p20
    %p27 = scmp.eq.s32.totalorder %s11, 1
    %p28 = por %p26, %p27
    %p29 = scmp.ne.s32.totalorder %s21, %s24
    %p30 = scmp.eq.s32.totalorder %s11, 0
    %p31 = por %p29, %p30
    %p32 = scmp.ne.s32.totalorder %s21, %s24
    %p33 = scmp.eq.s32.totalorder %s16, 1
    %p34 = por %p32, %p33
    %p35 = scmp.ne.s32.totalorder %s24, %s25
    %p36 = scmp.eq.s32.totalorder %s16, 0
    %p37 = por %p35, %p36
    %p38 = scmp.ne.s32.totalorder %s24, %s25
    %p39 = scmp.eq.s32.totalorder %s17, 1
    %p40 = por %p38, %p39
    %p42 = scmp.ne.s32.totalorder %s25, %s41
    %p43 = scmp.eq.s32.totalorder %s17, 0
    %p44 = por %p42, %p43
    %s46 = sadd.s32 %s45, 1
    %p49 = scmp.eq.s32.totalorder %s11, 1
    %p50 = scmp.ne.s32.totalorder %s45, %s47
    %p51 = scmp.eq.s32.totalorder %s11, 0
    %p52 = por %p50, %p51
    %p53 = scmp.ne.s32.totalorder %s45, %s47
    %p54 = scmp.eq.s32.totalorder %s16, 1
    %p55 = por %p53, %p54
    %p56 = scmp.ne.s32.totalorder %s47, %s48
    %p57 = scmp.eq.s32.totalorder %s16, 0
    %p58 = por %p56, %p57
    %p59 = scmp.ne.s32.totalorder %s47, %s48
    %p60 = scmp.eq.s32.totalorder %s17, 1
    %p61 = por %p59, %p60
    %p63 = scmp.ne.s32.totalorder %s48, %s62
    %p64 = scmp.eq.s32.totalorder %s17, 0
    %p65 = por %p63, %p64
    %s67 = sadd.s32 %s66, 1
    %p70 = scmp.eq.s32.totalorder %s11, 1
    %p71 = scmp.ne.s32.totalorder %s66, %s68
    %p72 = scmp.eq.s32.totalorder %s11, 0
    %p73 = por %p71, %p72
    %p74 = scmp.ne.s32.totalorder %s66, %s68
    %p75 = scmp.eq.s32.totalorder %s16, 1
    %p76 = por %p74, %p75
    %p77 = scmp.ne.s32.totalorder %s68, %s69
    %p78 = scmp.eq.s32.totalorder %s16, 0
    %p79 = por %p77, %p78
    %p80 = scmp.ne.s32.totalorder %s68, %s69
    %p81 = scmp.eq.s32.totalorder %s17, 1
    %p82 = por %p80, %p81
    %p84 = scmp.ne.s32.totalorder %s69, %s83
    %p85 = scmp.eq.s32.totalorder %s17, 0
    %p86 = por %p84, %p85
    %s88 = sadd.s32 %s87, 1
    %p91 = scmp.eq.s32.totalorder %s11, 1
    %p92 = scmp.ne.s32.totalorder %s87, %s89
    %p93 = scmp.eq.s32.totalorder %s11, 0
    %p94 = por %p92, %p93
    %p95 = scmp.ne.s32.totalorder %s87, %s89
    %p96 = scmp.eq.s32.totalorder %s16, 1
    %p97 = por %p95, %p96
    %p98 = scmp.ne.s32.totalorder %s89, %s90
    %p99 = scmp.eq.s32.totalorder %s16, 0
    %p100 = por %p98, %p99
    %p101 = scmp.ne.s32.totalorder %s89, %s90
    %p102 = scmp.eq.s32.totalorder %s17, 1
    %p103 = por %p101, %p102
    %p105 = scmp.ne.s32.totalorder %s90, %s104
    %p106 = scmp.eq.s32.totalorder %s17, 0
    %p107 = por %p105, %p106
    %s109 = sadd.s32 %s108, 1
    %p112 = scmp.eq.s32.totalorder %s11, 1
    %p113 = scmp.ne.s32.totalorder %s108, %s110
    %p114 = scmp.eq.s32.totalorder %s11, 0
    %p115 = por %p113, %p114
    %p116 = scmp.ne.s32.totalorder %s108, %s110
    %p117 = scmp.eq.s32.totalorder %s16, 1
    %p118 = por %p116, %p117
    %p119 = scmp.ne.s32.totalorder %s110, %s111
    %p120 = scmp.eq.s32.totalorder %s16, 0
    %p121 = por %p119, %p120
    %p122 = scmp.ne.s32.totalorder %s110, %s111
    %p123 = scmp.eq.s32.totalorder %s17, 1
    %p124 = por %p122, %p123
    %p126 = scmp.ne.s32.totalorder %s111, %s125
    %p127 = scmp.eq.s32.totalorder %s17, 0
    %p128 = por %p126, %p127
    %s129 = ssub.s32 %s11, %s18
    %p130 = scmp.eq.s32.totalorder %s129, 0
    %s132 = sadd.s32 %s131, 1
    %s133 = scalar_select %p130, %s131, %s132
    %p136 = pneg %p130
    %p137 = scmp.eq.s32.totalorder %s11, 1
    %p138 = por %p136, %p137
    %p139 = scmp.ne.s32.totalorder %s131, %s134
    %p140 = scmp.eq.s32.totalorder %s11, 0
    %p141 = por %p139, %p140
    %p142 = scmp.ne.s32.totalorder %s131, %s134
    %p143 = scmp.eq.s32.totalorder %s16, 1
    %p144 = por %p142, %p143
    %p145 = scmp.ne.s32.totalorder %s134, %s135
    %p146 = scmp.eq.s32.totalorder %s16, 0
    %p147 = por %p145, %p146
    %p148 = scmp.ne.s32.totalorder %s134, %s135
    %p149 = scmp.eq.s32.totalorder %s17, 1
    %p150 = por %p148, %p149
    %p152 = scmp.ne.s32.totalorder %s135, %s151
    %p153 = scmp.eq.s32.totalorder %s17, 0
    %p154 = por %p152, %p153
    %p155 = scmp.le.s32.totalorder 1, %s11
    %p156 = scmp.lt.s32.totalorder %s11, 3
    %p157 = pnand %p155, %p156
    %p158 = pneg %p157
    // Predicated region
    $region9: #{_ffn_impl.1} parent=5 // pred_check
      _
    $region10: #{_ffn_impl.1} parent=5 // pred_check_branch
      %160 = sbr.rel (%p157) target = $region12
    $region11: #{_ffn_impl.1} parent=5 // pred_region
      %s161 = ssub.s32 %s11, 1
      // Predicated region
      $region13: #{_ffn_impl.1} parent=11 // pred_check
        %p162 = pneg %p58
      $region14: #{_ffn_impl.1} parent=11 // pred_check_branch
        %164 = sbr.rel (%p162) target = $region16
      $region15: #{_ffn_impl.1} parent=11 // pred_region
        _
      $region16: #{_ffn_impl.1} parent=11 // pred_fallthru
        _
      // Predicated region
      $region17: #{_ffn_impl.1} parent=11 // pred_check
        %p165 = pneg %p79
      $region18: #{_ffn_impl.1} parent=11 // pred_check_branch
        %167 = sbr.rel (%p165) target = $region20
      $region19: #{_ffn_impl.1} parent=11 // pred_region
        _
      $region20: #{_ffn_impl.1} parent=11 // pred_fallthru
        _
      // Predicated region
      $region21: #{_ffn_impl.1} parent=11 // pred_check
        %p168 = pneg %p100
      $region22: #{_ffn_impl.1} parent=11 // pred_check_branch
        %170 = sbr.rel (%p168) target = $region24
      $region23: #{_ffn_impl.1} parent=11 // pred_region
        _
      $region24: #{_ffn_impl.1} parent=11 // pred_fallthru
        _
      // Predicated region
      $region25: #{_ffn_impl.1} parent=11 // pred_check
        %p171 = pneg %p121
      $region26: #{_ffn_impl.1} parent=11 // pred_check_branch
        %173 = sbr.rel (%p171) target = $region28
      $region27: #{_ffn_impl.1} parent=11 // pred_region
        _
      $region28: #{_ffn_impl.1} parent=11 // pred_fallthru
        _
    $region12: #{_ffn_impl.1} parent=5 // pred_fallthru
      _
    %p174 = scmp.lt.s32.totalorder %s11, 2
    // Predicated region
    $region29: #{_ffn_impl.1} parent=5 // pred_check
      %p175 = pneg %p174
    $region30: #{_ffn_impl.1} parent=5 // pred_check_branch
      %177 = sbr.rel (%p175) target = $region32
    $region31: #{_ffn_impl.1} parent=5 // pred_region
      // Predicated region
      $region33: #{_ffn_impl.1} parent=31 // pred_check
        %p178 = pneg %p31
      $region34: #{_ffn_impl.1} parent=31 // pred_check_branch
        %180 = sbr.rel (%p178) target = $region36
      $region35: #{_ffn_impl.1} parent=31 // pred_region
        %p181 = scmp.lt.s32.totalorder %s11, 1
        %s182 = scalar_select %p181, %s11, 1
        %s183 = smul.addr %s182, 2
        %s184 = smul.addr %s183, 8
        %s185 = scalar_lea.vmem %s0, %s184
      $region36: #{_ffn_impl.1} parent=31 // pred_fallthru
        _
    $region32: #{_ffn_impl.1} parent=5 // pred_fallthru
      _
    %p186 = scmp.le.s32.totalorder 1, %s11
    %p187 = scmp.lt.s32.totalorder %s11, 3
    %p188 = pnand %p186, %p187
    %p189 = pneg %p188
    // Predicated region
    $region37: #{_ffn_impl.1} parent=5 // pred_check
      _
    $region38: #{_ffn_impl.1} parent=5 // pred_check_branch
      %191 = sbr.rel (%p188) target = $region40
    $region39: #{_ffn_impl.1} parent=5 // pred_region
      %s192 = ssub.s32 %s11, 1
      %p193 = scmp.lt.s32.totalorder %s16, 1
      %s194 = scalar_select %p193, %s16, 1
      %s195 = smul.addr %s194, 2
      %s196 = smul.addr %s195, 8
      %s197 = scalar_lea.vmem %s0, %s196
      %p198 = pneg %p37
      %p199 = pneg %p34
      %p200 = pneg %p58
      %p201 = pneg %p55
      %p202 = pneg %p79
      %p203 = pneg %p76
      %p204 = pneg %p100
      %p205 = pneg %p97
      %p206 = pneg %p121
      %p207 = pneg %p118
      %p208 = pneg %p147
      %p209 = pneg %p144
      %p210 = scmp.lt.s32.totalorder %s16, 1
      %s211 = scalar_select %p210, %s16, 1
      %s212 = smul.addr %s211, 2
      %s213 = smul.addr %s212, 8
      %s214 = scalar_lea.vmem %s5, %s213
      %p215 = scmp.lt.s32.totalorder %s16, 1
      %s216 = scalar_select %p215, %s16, 1
      %s217 = smul.addr %s216, 2
      %s218 = smul.addr %s217, 8
      %s219 = scalar_lea.vmem %s0, %s218
      %p220 = scmp.lt.s32.totalorder %s16, 1
      %s221 = scalar_select %p220, %s16, 1
      %s222 = smul.addr %s221, 2
      %s223 = smul.addr %s222, 8
      %s224 = scalar_lea.vmem %s5, %s223
      %v225 = vld [vmem:[%s219] sm:$0xff]
      %v226 = vld [vmem:[%s219 + $0x8] sm:$0xff]
      %v227 = vld [vmem:[%s1] sm:$0xff]
      %v228 = vld [vmem:[%s1 + $0x8] sm:$0xff]
      %v229 = vld [vmem:[%s1 + $0x10] sm:$0xff]
      %v230 = vld [vmem:[%s1 + $0x18] sm:$0xff]
      %v231 = vld [vmem:[%s1 + $0x20] sm:$0xff]
      %v232 = vld [vmem:[%s1 + $0x28] sm:$0xff]
      %v233 = vld [vmem:[%s1 + $0x30] sm:$0xff]
      %v234 = vld [vmem:[%s1 + $0x38] sm:$0xff]
      %v235 = vld [vmem:[%s1 + $0x40] sm:$0xff]
      %v236 = vld [vmem:[%s1 + $0x48] sm:$0xff]
      %v237 = vld [vmem:[%s1 + $0x50] sm:$0xff]
      %v238 = vld [vmem:[%s1 + $0x58] sm:$0xff]
      %v239 = vld [vmem:[%s1 + $0x60] sm:$0xff]
      %v240 = vld [vmem:[%s1 + $0x68] sm:$0xff]
      %v241 = vld [vmem:[%s1 + $0x70] sm:$0xff]
      %v242 = vld [vmem:[%s1 + $0x78] sm:$0xff]
      %v243 = vld [vmem:[%s1 + $0x80] sm:$0xff]
      %v244 = vld [vmem:[%s1 + $0x88] sm:$0xff]
      %v245 = vld [vmem:[%s1 + $0x90] sm:$0xff]
      %v246 = vld [vmem:[%s1 + $0x98] sm:$0xff]
      %v247 = vld [vmem:[%s1 + $0xa0] sm:$0xff]
      %v248 = vld [vmem:[%s1 + $0xa8] sm:$0xff]
      %v249 = vld [vmem:[%s1 + $0xb0] sm:$0xff]
      %v250 = vld [vmem:[%s1 + $0xb8] sm:$0xff]
      %v251 = vld [vmem:[%s1 + $0xc0] sm:$0xff]
      %v252 = vld [vmem:[%s1 + $0xc8] sm:$0xff]
      %v253 = vld [vmem:[%s1 + $0xd0] sm:$0xff]
      %v254 = vld [vmem:[%s1 + $0xd8] sm:$0xff]
      %v255 = vld [vmem:[%s1 + $0xe0] sm:$0xff]
      %v256 = vld [vmem:[%s1 + $0xe8] sm:$0xff]
      %v257 = vld [vmem:[%s1 + $0xf0] sm:$0xff]
      %v258 = vld [vmem:[%s1 + $0xf8] sm:$0xff]
      %v259 = vld [vmem:[%s2] sm:$0x1]
      %v261 = vlaneseq
      %v262 = vshrl.u32 %v261, 7
      %v263 = vsub.s32 0, %v262
      %v264 = vrot.slane %v259, %v263
      %266 = vmatprep.subr.mxu0 0.0
      %267 = vmatpush1.msra.mxu0 %v242
      %268 = vmatprep.subr.mxu0 0.0
      %269 = vmatpush1.msra.mxu0 %v241
      %270 = vmatprep.subr.mxu0 0.0
      %271 = vmatpush1.msra.mxu0 %v240
      %272 = vmatprep.subr.mxu0 0.0
      %273 = vmatpush1.msra.mxu0 %v239
      %274 = vmatprep.subr.mxu0 0.0
      %275 = vmatpush1.msra.mxu0 %v238
      %276 = vmatprep.subr.mxu0 0.0
      %277 = vmatpush1.msra.mxu0 %v237
      %278 = vmatprep.subr.mxu0 0.0
      %279 = vmatpush1.msra.mxu0 %v236
      %280 = vmatprep.subr.mxu0 0.0
      %281 = vmatpush1.msra.mxu0 %v235
      %282 = vmatprep.subr.mxu0 0.0
      %283 = vmatpush1.msra.mxu0 %v234
      %284 = vmatprep.subr.mxu0 0.0
      %285 = vmatpush1.msra.mxu0 %v233
      %286 = vmatprep.subr.mxu0 0.0
      %287 = vmatpush1.msra.mxu0 %v232
      %288 = vmatprep.subr.mxu0 0.0
      %289 = vmatpush1.msra.mxu0 %v231
      %290 = vmatprep.subr.mxu0 0.0
      %291 = vmatpush1.msra.mxu0 %v230
      %292 = vmatprep.subr.mxu0 0.0
      %293 = vmatpush1.msra.mxu0 %v229
      %294 = vmatprep.subr.mxu0 0.0
      %295 = vmatpush1.msra.mxu0 %v228
      %296 = vmatprep.subr.mxu0 0.0
      %297 = vmatpush1.msra.mxu0 %v227
      %298 = vmatprep.subr.mxu0 0.0
      %299 = vmatpush2.msra.mxu0 %v258
      %300 = vmatprep.subr.mxu0 0.0
      %301 = vmatpush2.msra.mxu0 %v257
      %302 = vmatprep.subr.mxu0 0.0
      %303 = vmatpush2.msra.mxu0 %v256
      %304 = vmatprep.subr.mxu0 0.0
      %305 = vmatpush2.msra.mxu0 %v255
      %306 = vmatprep.subr.mxu0 0.0
      %307 = vmatpush2.msra.mxu0 %v254
      %308 = vmatprep.subr.mxu0 0.0
      %309 = vmatpush2.msra.mxu0 %v253
      %310 = vmatprep.subr.mxu0 0.0
      %311 = vmatpush2.msra.mxu0 %v252
      %312 = vmatprep.subr.mxu0 0.0
      %313 = vmatpush2.msra.mxu0 %v251
      %314 = vmatprep.subr.mxu0 0.0
      %315 = vmatpush2.msra.mxu0 %v250
      %316 = vmatprep.subr.mxu0 0.0
      %317 = vmatpush2.msra.mxu0 %v249
      %318 = vmatprep.subr.mxu0 0.0
      %319 = vmatpush2.msra.mxu0 %v248
      %320 = vmatprep.subr.mxu0 0.0
      %321 = vmatpush2.msra.mxu0 %v247
      %322 = vmatprep.subr.mxu0 0.0
      %323 = vmatpush2.msra.mxu0 %v246
      %324 = vmatprep.subr.mxu0 0.0
      %325 = vmatpush2.msra.mxu0 %v245
      %326 = vmatprep.subr.mxu0 0.0
      %327 = vmatpush2.msra.mxu0 %v244
      %328 = vmatprep.subr.mxu0 0.0
      %329 = vmatpush2.msra.mxu0 %v243
      %330 = vmatprep.mubr.f32.mxu0 %v226
      %331 = vmatmul.mubr.f32.gmra.mxu0 %v225
      %v332 = vpop.f32.mrf.mxu0
      %v333 = vadd.f32 %v264, %v332
      %v334 = vpop.f32.mrf.mxu0
      %335 = vdwg.mxu0
      %v336 = vmax.f32 %v333, 0.0
      %v337 = vld [vmem:[%s3] sm:$0xff]
      %v338 = vld [vmem:[%s3 + $0x8] sm:$0xff]
      %v339 = vld [vmem:[%s3 + $0x10] sm:$0xff]
      %v340 = vld [vmem:[%s3 + $0x18] sm:$0xff]
      %v341 = vld [vmem:[%s3 + $0x20] sm:$0xff]
      %v342 = vld [vmem:[%s3 + $0x28] sm:$0xff]
      %v343 = vld [vmem:[%s3 + $0x30] sm:$0xff]
      %v344 = vld [vmem:[%s3 + $0x38] sm:$0xff]
      %v345 = vld [vmem:[%s3 + $0x40] sm:$0xff]
      %v346 = vld [vmem:[%s3 + $0x48] sm:$0xff]
      %v347 = vld [vmem:[%s3 + $0x50] sm:$0xff]
      %v348 = vld [vmem:[%s3 + $0x58] sm:$0xff]
      %v349 = vld [vmem:[%s3 + $0x60] sm:$0xff]
      %v350 = vld [vmem:[%s3 + $0x68] sm:$0xff]
      %v351 = vld [vmem:[%s3 + $0x70] sm:$0xff]
      %v352 = vld [vmem:[%s3 + $0x78] sm:$0xff]
      %v353 = vld [vmem:[%s3 + $0x80] sm:$0xff]
      %v354 = vld [vmem:[%s3 + $0x88] sm:$0xff]
      %v355 = vld [vmem:[%s3 + $0x90] sm:$0xff]
      %v356 = vld [vmem:[%s3 + $0x98] sm:$0xff]
      %v357 = vld [vmem:[%s3 + $0xa0] sm:$0xff]
      %v358 = vld [vmem:[%s3 + $0xa8] sm:$0xff]
      %v359 = vld [vmem:[%s3 + $0xb0] sm:$0xff]
      %v360 = vld [vmem:[%s3 + $0xb8] sm:$0xff]
      %v361 = vld [vmem:[%s3 + $0xc0] sm:$0xff]
      %v362 = vld [vmem:[%s3 + $0xc8] sm:$0xff]
      %v363 = vld [vmem:[%s3 + $0xd0] sm:$0xff]
      %v364 = vld [vmem:[%s3 + $0xd8] sm:$0xff]
      %v365 = vld [vmem:[%s3 + $0xe0] sm:$0xff]
      %v366 = vld [vmem:[%s3 + $0xe8] sm:$0xff]
      %v367 = vld [vmem:[%s3 + $0xf0] sm:$0xff]
      %v368 = vld [vmem:[%s3 + $0xf8] sm:$0xff]
      %v369 = vld [vmem:[%s4] sm:$0x3]
      %v371 = vlaneseq
      %v372 = vshrl.u32 %v371, 7
      %v373 = vsub.s32 0, %v372
      %v374 = vrot.slane %v369, %v373
      %v375 = vlaneseq
      %v376 = vshrl.u32 %v375, 7
      %v377 = vsub.s32 1, %v376
      %v378 = vrot.slane %v369, %v377
      %381 = vmatprep.subr.mxu0 %v368
      %382 = vmatpush1.msra.mxu0 %v367
      %383 = vmatprep.subr.mxu0 %v366
      %384 = vmatpush1.msra.mxu0 %v365
      %385 = vmatprep.subr.mxu0 %v364
      %386 = vmatpush1.msra.mxu0 %v363
      %387 = vmatprep.subr.mxu0 %v362
      %388 = vmatpush1.msra.mxu0 %v361
      %389 = vmatprep.subr.mxu0 %v360
      %390 = vmatpush1.msra.mxu0 %v359
      %391 = vmatprep.subr.mxu0 %v358
      %392 = vmatpush1.msra.mxu0 %v357
      %393 = vmatprep.subr.mxu0 %v356
      %394 = vmatpush1.msra.mxu0 %v355
      %395 = vmatprep.subr.mxu0 %v354
      %396 = vmatpush1.msra.mxu0 %v353
      %397 = vmatprep.subr.mxu0 %v352
      %398 = vmatpush1.msra.mxu0 %v351
      %399 = vmatprep.subr.mxu0 %v350
      %400 = vmatpush1.msra.mxu0 %v349
      %401 = vmatprep.subr.mxu0 %v348
      %402 = vmatpush1.msra.mxu0 %v347
      %403 = vmatprep.subr.mxu0 %v346
      %404 = vmatpush1.msra.mxu0 %v345
      %405 = vmatprep.subr.mxu0 %v344
      %406 = vmatpush1.msra.mxu0 %v343
      %407 = vmatprep.subr.mxu0 %v342
      %408 = vmatpush1.msra.mxu0 %v341
      %409 = vmatprep.subr.mxu0 %v340
      %410 = vmatpush1.msra.mxu0 %v339
      %411 = vmatprep.subr.mxu0 %v338
      %412 = vmatpush1.msra.mxu0 %v337
      %413 = vmatprep.subr.mxu0 0.0
      %414 = vmatpush2.msra.mxu0 0.0
      %415 = vmatprep.subr.mxu0 0.0
      %416 = vmatpush2.msra.mxu0 0.0
      %417 = vmatprep.subr.mxu0 0.0
      %418 = vmatpush2.msra.mxu0 0.0
      %419 = vmatprep.subr.mxu0 0.0
      %420 = vmatpush2.msra.mxu0 0.0
      %421 = vmatprep.subr.mxu0 0.0
      %422 = vmatpush2.msra.mxu0 0.0
      %423 = vmatprep.subr.mxu0 0.0
      %424 = vmatpush2.msra.mxu0 0.0
      %425 = vmatprep.subr.mxu0 0.0
      %426 = vmatpush2.msra.mxu0 0.0
      %427 = vmatprep.subr.mxu0 0.0
      %428 = vmatpush2.msra.mxu0 0.0
      %429 = vmatprep.subr.mxu0 0.0
      %430 = vmatpush2.msra.mxu0 0.0
      %431 = vmatprep.subr.mxu0 0.0
      %432 = vmatpush2.msra.mxu0 0.0
      %433 = vmatprep.subr.mxu0 0.0
      %434 = vmatpush2.msra.mxu0 0.0
      %435 = vmatprep.subr.mxu0 0.0
      %436 = vmatpush2.msra.mxu0 0.0
      %437 = vmatprep.subr.mxu0 0.0
      %438 = vmatpush2.msra.mxu0 0.0
      %439 = vmatprep.subr.mxu0 0.0
      %440 = vmatpush2.msra.mxu0 0.0
      %441 = vmatprep.subr.mxu0 0.0
      %442 = vmatpush2.msra.mxu0 0.0
      %443 = vmatprep.subr.mxu0 0.0
      %444 = vmatpush2.msra.mxu0 0.0
      %445 = vmatprep.mubr.f32.mxu0 0.0
      %446 = vmatmul.mubr.f32.gmra.mxu0 %v336
      %v447 = vpop.f32.mrf.mxu0
      %v448 = vadd.f32 %v374, %v447
      %v449 = vpop.f32.mrf.mxu0
      %v450 = vadd.f32 %v378, %v449
      %451 = vdwg.mxu0
      %452 = vst [vmem:[%s224] sm:$0xff] %v448
      %453 = vst [vmem:[%s224 + $0x8] sm:$0xff] %v450
      %p454 = scmp.lt.s32.totalorder %s16, 1
      %s455 = scalar_select %p454, %s16, 1
      %s456 = smul.addr %s455, 2
      %s457 = smul.addr %s456, 8
      %s458 = scalar_lea.vmem %s5, %s457
      // Predicated region
      $region41: #{_ffn_impl.1} parent=39 // pred_check
        %p459 = pneg %p144
      $region42: #{_ffn_impl.1} parent=39 // pred_check_branch
        %461 = sbr.rel (%p459) target = $region44
      $region43: #{_ffn_impl.1} parent=39 // pred_region
        _
      $region44: #{_ffn_impl.1} parent=39 // pred_fallthru
        _
    $region40: #{_ffn_impl.1} parent=5 // pred_fallthru
      _
    %p462 = scmp.le.s32.totalorder 2, %s11
    // Predicated region
    $region45: #{_ffn_impl.1} parent=5 // pred_check
      %p463 = pneg %p462
    $region46: #{_ffn_impl.1} parent=5 // pred_check_branch
      %465 = sbr.rel (%p463) target = $region48
    $region47: #{_ffn_impl.1} parent=5 // pred_region
      %s466 = ssub.s32 %s11, 2
      // Predicated region
      $region49: #{_ffn_impl.1} parent=47 // pred_check
        %p467 = pneg %p150
      $region50: #{_ffn_impl.1} parent=47 // pred_check_branch
        %469 = sbr.rel (%p467) target = $region52
      $region51: #{_ffn_impl.1} parent=47 // pred_region
        %p470 = scmp.lt.s32.totalorder %s17, 1
        %s471 = scalar_select %p470, %s17, 1
        %s472 = smul.addr %s471, 2
        %s473 = smul.addr %s472, 8
        %s474 = scalar_lea.vmem %s5, %s473
      $region52: #{_ffn_impl.1} parent=47 // pred_fallthru
        _
    $region48: #{_ffn_impl.1} parent=5 // pred_fallthru
      _
  $region6: #{_ffn_impl.1} parent=0 // loop_footer
    %s15 = sadd.s32 1, %s11
  $region7: #{_ffn_impl.1} parent=0 // loop_footer_branch
    %10 = sbr.rel target = $region3
  $region8: #{_ffn_impl.1} parent=0 // loop_exit
    _

</llo_original>
